<compile_context>
chip_gen: v5e
topology: v5e:2x2
jax: 0.10.0
libtpu: 0.0.40
codegen_flags: <defaults>
</compile_context>

<pallas_src>
import jax
import jax.numpy as jnp
import numpy as np
from jax.experimental import pallas as pl
from jax.experimental.pallas import tpu as pltpu

LEAKY_SLOPE = 0.01  # nn.LeakyReLU() default negative_slope


def _fedadg_disc_kernel_folded(y_ref, z_ref, wz1_ref, wy1_ref, b1_ref, w2_ref,
                               b2_ref, o_ref):
    # h = z @ (Wz @ W1^T) + y @ (Wy @ W1^T) + b1   (two bf16 MXU dots, f32 acc)
    h = (jnp.dot(z_ref[...], wz1_ref[...], preferred_element_type=jnp.float32)
         + jnp.dot(y_ref[...], wy1_ref[...], preferred_element_type=jnp.float32)
         + b1_ref[...])
    # LeakyReLU(0.01)
    h = jnp.maximum(h, LEAKY_SLOPE * h)
    # Linear(1024, 1) as a VPU multiply + lane reduce (no N=1 MXU mat-vec), b2
    # is an SMEM scalar; then Sigmoid.
    logit = jnp.sum(h * w2_ref[...], axis=-1, keepdims=True) + b2_ref[0]
    o_ref[...] = (1.0 / (1.0 + jnp.exp(-logit))).astype(o_ref.dtype)


def _fedadg_disc_kernel_proj(y_ref, z_ref, wz_ref, wy_ref, w1_ref, b1_ref,
                             w2_ref, b2_ref, o_ref):
    # Unfolded path (used only when folding would increase FLOPs/weight bytes).
    # projection(cat([z, y])) == z @ Wz + y @ Wy  (no concat copy).
    feat = (jnp.dot(z_ref[...], wz_ref[...], preferred_element_type=jnp.float32)
            + jnp.dot(y_ref[...], wy_ref[...], preferred_element_type=jnp.float32))
    h = (jnp.dot(feat.astype(w1_ref.dtype), w1_ref[...],
                 preferred_element_type=jnp.float32) + b1_ref[...])
    h = jnp.maximum(h, LEAKY_SLOPE * h)
    logit = jnp.sum(h * w2_ref[...], axis=-1, keepdims=True) + b2_ref[0]
    o_ref[...] = (1.0 / (1.0 + jnp.exp(-logit))).astype(o_ref.dtype)


def prepare_fedadg_discriminator_params(w_proj, w1, b1, w2, b2, *, hidden_size,
                                        param_dtype=jnp.bfloat16):
    """One-time weight preprocessing (hoisted out of the per-forward path).

    w_proj: (rp_size, hidden_size + num_labels)  projection.weight (no bias)
    w1,b1:  (1024, rp_size), (1024,)             features_pro Linear #1
    w2,b2:  (1, 1024), (1,)                      features_pro Linear #2
    """
    rp, HL = w_proj.shape
    H = hidden_size
    L = HL - H
    hid = w1.shape[0]

    w_projT = jnp.asarray(w_proj, jnp.float32).T        # (H+L, rp)
    wz = w_projT[:H, :]                                  # (H, rp)
    wy = w_projT[H:, :]                                  # (L, rp)
    w1T = jnp.asarray(w1, jnp.float32).T                 # (rp, hid)
    b1r = jnp.asarray(b1, jnp.float32).reshape(1, hid)   # f32 epilogue bias
    w2r = jnp.asarray(w2, jnp.float32).reshape(1, hid)   # final layer as a row
    b2r = jnp.asarray(b2, jnp.float32).reshape(1)        # SMEM scalar

    # Fold projection into Linear #1 when it lowers per-row MACs:
    # (H+L)*hid < (H+L)*rp + rp*hid.  Fold in f32, cast the result to bf16.
    fold = (H + L) * hid < (H + L) * rp + rp * hid
    if fold:
        wz1 = (wz @ w1T).astype(param_dtype)             # (H, hid)
        wy1 = (wy @ w1T).astype(param_dtype)             # (L, hid)
        mats = (wz1, wy1)
    else:
        mats = (wz.astype(param_dtype), wy.astype(param_dtype),
                w1T.astype(param_dtype))

    return {"fold": fold, "H": H, "L": L, "rp": rp, "hid": hid,
            "mats": mats, "b1": b1r, "w2": w2r, "b2": b2r,
            "param_dtype": param_dtype}


def fedadg_discriminator_pallas(y, z, params, *, block_b=256):
    """Pallas forward for FedADG_Discriminator.

    y: (B, num_labels), z: (B, ...) flattened to (B, hidden_size) like
    z.view(B, -1).  Returns (B, 1) sigmoid outputs.
    block_b=256 fills a 256-wide v6e/v7x MXU pass; use 128 on v5e if desired.
    """
    H, L, hid = params["H"], params["L"], params["hid"]
    fold = params["fold"]
    pdt = params["param_dtype"]

    B = z.shape[0]
    out_dtype = z.dtype
    z2 = z.reshape(B, -1).astype(pdt)
    y2 = y.astype(pdt)
    assert z2.shape[1] == H and y2.shape[1] == L

    # Tile the batch; pad to a tile multiple so BlockSpecs stay legal.
    tb = min(block_b, B)
    nb = pl.cdiv(B, tb)
    Bp = nb * tb
    if Bp != B:
        pad = Bp - B
        z2 = jnp.pad(z2, ((0, pad), (0, 0)))
        y2 = jnp.pad(y2, ((0, pad), (0, 0)))

    def resident(shape):
        return pl.BlockSpec(shape, lambda i: (0, 0))

    if fold:
        kernel = _fedadg_disc_kernel_folded
        mat_specs = [resident((H, hid)), resident((L, hid))]
    else:
        kernel = _fedadg_disc_kernel_proj
        rp = params["rp"]
        mat_specs = [resident((H, rp)), resident((L, rp)), resident((rp, hid))]

    out = pl.pallas_call(
        kernel,
        out_shape=jax.ShapeDtypeStruct((Bp, 1), jnp.float32),
        grid=(nb,),
        in_specs=[
            pl.BlockSpec((tb, L), lambda i: (i, 0)),   # y tile (streams, bf16)
            pl.BlockSpec((tb, H), lambda i: (i, 0)),   # z tile (streams, bf16)
            *mat_specs,                                # matmul weights (resident)
            resident((1, hid)),                        # b1   (f32, resident)
            resident((1, hid)),                        # w2 row (f32, resident)
            pl.BlockSpec(memory_space=pltpu.MemorySpace.SMEM),  # b2 scalar
        ],
        out_specs=pl.BlockSpec((tb, 1), lambda i: (i, 0)),
        compiler_params=pltpu.CompilerParams(
            dimension_semantics=("parallel",),     # megacore split on v7x
            vmem_limit_bytes=32 * 1024 * 1024,     # fits v5e/v6e/v7x budgets
        ),
    )(y2, z2, *params["mats"], params["b1"], params["w2"], params["b2"])

    return out[:B].astype(out_dtype)


def fedadg_discriminator_reference(y, z, w_proj, w1, b1, w2, b2):
    """Pure-JAX f32 reference mirroring the torch forward."""
    feature = z.reshape(z.shape[0], -1)
    feature = jnp.concatenate([feature, y], axis=1)
    feature = feature @ w_proj.T
    h = feature @ w1.T + b1
    h = jnp.where(h >= 0.0, h, LEAKY_SLOPE * h)
    return jax.nn.sigmoid(h @ w2.T + b2)


if __name__ == "__main__":
    # TODO(synk): self.optimizer and the one-time projection-weight
    # normalization in __init__ are setup-time, not forward ops; the
    # normalization is reproduced below when building the parameters.
    key = jax.random.PRNGKey(0)
    ky, kz, kp, k1, kb1, k2, kb2 = jax.random.split(key, 7)

    batch, num_labels, hidden_size, rp_size = 2, 4, 32, 64
    n_hidden = 1024  # fixed by the module: nn.Linear(rp_size, 1024)

    # z has a non-flat trailing shape to exercise z.view(B, -1): 8*4 == hidden_size
    z = jax.random.normal(kz, (batch, 8, 4), dtype=jnp.float32)
    y = jax.random.normal(ky, (batch, num_labels), dtype=jnp.float32)

    w_proj = jax.random.normal(kp, (rp_size, hidden_size + num_labels), jnp.float32)
    w_proj = w_proj / jnp.linalg.norm(w_proj)  # weight.div_(torch.norm(weight))
    w1 = jax.random.normal(k1, (n_hidden, rp_size), jnp.float32) / jnp.sqrt(rp_size)
    b1 = jax.random.normal(kb1, (n_hidden,), jnp.float32) * 0.1
    w2 = jax.random.normal(k2, (1, n_hidden), jnp.float32) / jnp.sqrt(n_hidden)
    b2 = jax.random.normal(kb2, (1,), jnp.float32) * 0.1

    # One-time parameter prep (transpose / split / fold / bf16 cast), then the
    # per-forward path is a single pallas_call.
    params = prepare_fedadg_discriminator_params(
        w_proj, w1, b1, w2, b2, hidden_size=hidden_size)
    out = fedadg_discriminator_pallas(y, z, params)
    jax.block_until_ready(out)

    ref = fedadg_discriminator_reference(y, z, w_proj, w1, b1, w2, b2)
    assert out.shape == (batch, 1)
    # Tolerance accounts for explicit bf16 kernel inputs (f32 accumulation) vs
    # the f32 XLA reference (itself MXU default-precision).
    np.testing.assert_allclose(np.asarray(out), np.asarray(ref), rtol=2e-2, atol=2e-2)

    print("KERNEL_OK")
</pallas_src>

<mosaic_0001>
module attributes {stable_mosaic.version = 11 : i64} {
  func.func @_fedadg_disc_kernel_folded(%arg0: i32, %arg1: memref<2x4xbf16, #tpu.memory_space<vmem>>, %arg2: memref<2x32xbf16, #tpu.memory_space<vmem>>, %arg3: memref<32x1024xbf16, #tpu.memory_space<vmem>>, %arg4: memref<4x1024xbf16, #tpu.memory_space<vmem>>, %arg5: memref<1x1024xf32, #tpu.memory_space<vmem>>, %arg6: memref<1x1024xf32, #tpu.memory_space<vmem>>, %arg7: memref<1xf32, #tpu.memory_space<smem>>, %arg8: memref<2x1xf32, #tpu.memory_space<vmem>>) attributes {dimension_semantics = [#tpu.dimension_semantics<parallel>], iteration_bounds = array<i64: 1>, scalar_prefetch = 0 : i64, scratch_operands = 0 : i64, tpu.core_type = #tpu.core_type<tc>, window_params = [{transform_indices = @transform_0, window_bounds = array<i64: 2, 4>}, {transform_indices = @transform_1, window_bounds = array<i64: 2, 32>}, {pipeline_mode = #tpu.pipeline_mode<synchronous>, transform_indices = @transform_2, window_bounds = array<i64: 32, 1024>}, {pipeline_mode = #tpu.pipeline_mode<synchronous>, transform_indices = @transform_3, window_bounds = array<i64: 4, 1024>}, {pipeline_mode = #tpu.pipeline_mode<synchronous>, transform_indices = @transform_4, window_bounds = array<i64: 1, 1024>}, {pipeline_mode = #tpu.pipeline_mode<synchronous>, transform_indices = @transform_5, window_bounds = array<i64: 1, 1024>}, {transform_indices = @transform_6, window_bounds = array<i64: 1>}, {transform_indices = @transform_7, window_bounds = array<i64: 2, 1>}]} {
    %c0 = arith.constant 0 : index
    %c0_0 = arith.constant 0 : index
    %0 = vector.load %arg2[%c0, %c0_0] : memref<2x32xbf16, #tpu.memory_space<vmem>>, vector<2x32xbf16>
    %c0_1 = arith.constant 0 : index
    %c0_2 = arith.constant 0 : index
    %1 = vector.load %arg3[%c0_1, %c0_2] : memref<32x1024xbf16, #tpu.memory_space<vmem>>, vector<32x1024xbf16>
    %cst = arith.constant dense<0.000000e+00> : vector<2x1024xf32>
    %2 = tpu.matmul %0, %1, %cst {dimension_numbers = #tpu.dot_dimension_numbers<[1], [0], [0], [1], [0, 0, 1, 1], [], []>} : vector<2x32xbf16>, vector<32x1024xbf16>, vector<2x1024xf32> -> vector<2x1024xf32>
    %c0_3 = arith.constant 0 : index
    %c0_4 = arith.constant 0 : index
    %3 = vector.load %arg1[%c0_3, %c0_4] : memref<2x4xbf16, #tpu.memory_space<vmem>>, vector<2x4xbf16>
    %c0_5 = arith.constant 0 : index
    %c0_6 = arith.constant 0 : index
    %4 = vector.load %arg4[%c0_5, %c0_6] : memref<4x1024xbf16, #tpu.memory_space<vmem>>, vector<4x1024xbf16>
    %cst_7 = arith.constant dense<0.000000e+00> : vector<2x1024xf32>
    %5 = tpu.matmul %3, %4, %cst_7 {dimension_numbers = #tpu.dot_dimension_numbers<[1], [0], [0], [1], [0, 0, 1, 1], [], []>} : vector<2x4xbf16>, vector<4x1024xbf16>, vector<2x1024xf32> -> vector<2x1024xf32>
    %6 = arith.addf %2, %5 : vector<2x1024xf32>
    %c0_8 = arith.constant 0 : index
    %c0_9 = arith.constant 0 : index
    %7 = vector.load %arg5[%c0_8, %c0_9] : memref<1x1024xf32, #tpu.memory_space<vmem>>, vector<1x1024xf32>
    %8 = vector.broadcast %7 : vector<1x1024xf32> to vector<2x1024xf32>
    %9 = arith.addf %6, %8 : vector<2x1024xf32>
    %cst_10 = arith.constant 0.00999999977 : f32
    %10 = vector.broadcast %cst_10 : f32 to vector<2x1024xf32>
    %11 = arith.mulf %10, %9 : vector<2x1024xf32>
    %12 = arith.maximumf %9, %11 : vector<2x1024xf32>
    %c0_11 = arith.constant 0 : index
    %c0_12 = arith.constant 0 : index
    %13 = vector.load %arg6[%c0_11, %c0_12] : memref<1x1024xf32, #tpu.memory_space<vmem>>, vector<1x1024xf32>
    %14 = vector.broadcast %13 : vector<1x1024xf32> to vector<2x1024xf32>
    %15 = arith.mulf %12, %14 : vector<2x1024xf32>
    %cst_13 = arith.constant dense<0.000000e+00> : vector<2xf32>
    %16 = vector.multi_reduction <add>, %15, %cst_13 [1] : vector<2x1024xf32> to vector<2xf32>
    %17 = vector.shape_cast %16 : vector<2xf32> to vector<2x1xf32>
    %c0_14 = arith.constant 0 : index
    %18 = memref.load %arg7[%c0_14] : memref<1xf32, #tpu.memory_space<smem>>
    %19 = vector.broadcast %18 : f32 to vector<2x1xf32>
    %20 = arith.addf %17, %19 : vector<2x1xf32>
    %cst_15 = arith.constant 0.000000e+00 : f32
    %21 = vector.broadcast %cst_15 : f32 to vector<2x1xf32>
    %22 = arith.subf %21, %20 : vector<2x1xf32>
    %23 = math.exp %22 : vector<2x1xf32>
    %cst_16 = arith.constant 1.000000e+00 : f32
    %24 = vector.broadcast %cst_16 : f32 to vector<2x1xf32>
    %25 = arith.addf %24, %23 : vector<2x1xf32>
    %cst_17 = arith.constant 1.000000e+00 : f32
    %26 = vector.broadcast %cst_17 : f32 to vector<2x1xf32>
    %27 = arith.divf %26, %25 : vector<2x1xf32>
    %c0_18 = arith.constant 0 : index
    %c0_19 = arith.constant 0 : index
    %28 = vector.load %arg8[%c0_18, %c0_19] : memref<2x1xf32, #tpu.memory_space<vmem>>, vector<2x1xf32>
    tpu.vector_store %arg8[%c0_18, %c0_19], %27 {strides = array<i32>} : memref<2x1xf32, #tpu.memory_space<vmem>>, vector<2x1xf32>,
    return
  }
  func.func @transform_0(%arg0: i32) -> (i32, i32) {
    %c0_i32 = arith.constant 0 : i32
    %c0_i32_0 = arith.constant 0 : i32
    return %arg0, %c0_i32 : i32, i32
  }
  func.func @transform_1(%arg0: i32) -> (i32, i32) {
    %c0_i32 = arith.constant 0 : i32
    %c0_i32_0 = arith.constant 0 : i32
    return %arg0, %c0_i32 : i32, i32
  }
  func.func @transform_2(%arg0: i32) -> (i32, i32) {
    %c0_i32 = arith.constant 0 : i32
    %c0_i32_0 = arith.constant 0 : i32
    %c0_i32_1 = arith.constant 0 : i32
    return %c0_i32, %c0_i32_0 : i32, i32
  }
  func.func @transform_3(%arg0: i32) -> (i32, i32) {
    %c0_i32 = arith.constant 0 : i32
    %c0_i32_0 = arith.constant 0 : i32
    %c0_i32_1 = arith.constant 0 : i32
    return %c0_i32, %c0_i32_0 : i32, i32
  }
  func.func @transform_4(%arg0: i32) -> (i32, i32) {
    %c0_i32 = arith.constant 0 : i32
    %c0_i32_0 = arith.constant 0 : i32
    %c0_i32_1 = arith.constant 0 : i32
    return %c0_i32, %c0_i32_0 : i32, i32
  }
  func.func @transform_5(%arg0: i32) -> (i32, i32) {
    %c0_i32 = arith.constant 0 : i32
    %c0_i32_0 = arith.constant 0 : i32
    %c0_i32_1 = arith.constant 0 : i32
    return %c0_i32, %c0_i32_0 : i32, i32
  }
  func.func @transform_6(%arg0: i32) -> i32 {
    %c0_i32 = arith.constant 0 : i32
    %c0_i32_0 = arith.constant 0 : i32
    return %c0_i32 : i32
  }
  func.func @transform_7(%arg0: i32) -> (i32, i32) {
    %c0_i32 = arith.constant 0 : i32
    %c0_i32_0 = arith.constant 0 : i32
    return %arg0, %c0_i32 : i32, i32
  }
}

</mosaic_0001>

<llo_original>
// kernel: tpu_custom_call.1
$region0: #{tpu_custom_call.1}
  #allocation0 [shape = 'u32[]', space=smem, size = 0x4, offset = 0x4, fixed_abs, tag = 'smem constant byte address 0x4 - core index']
  #allocation1 [shape = 'u32[72,128]{1,0:T(1,128)}', space=vmem, size = 0x9000, scoped, tag = 'internal scratch']
  #allocation2 [shape = 'f32[1]{0:T(128)S(6)}', space=smem, size = 0x200, scoped, tag = 'scoped memory for tpu_custom_call.1']
  %s0 = inlined_call_operand.vmem [shape: bf16[2,4], index: 0, kind: input, shape index: {}]
  %s1 = inlined_call_operand.vmem [shape: bf16[2,32], index: 1, kind: input, shape index: {}]
  %s2 = inlined_call_operand.hbm [shape: bf16[32,1024], index: 2, kind: input, shape index: {}]
  %s3 = inlined_call_operand.hbm [shape: bf16[4,1024], index: 3, kind: input, shape index: {}]
  %s4 = inlined_call_operand.hbm [shape: f32[1,1024], index: 4, kind: input, shape index: {}]
  %s5 = inlined_call_operand.hbm [shape: f32[1,1024], index: 5, kind: input, shape index: {}]
  %s6 = inlined_call_operand.<no memory space> [shape: f32[1], index: 6, kind: input, shape index: {}]
  %s7 = inlined_call_operand.vmem [shape: f32[2,1], index: 7, kind: output, shape index: {}]
  %s8 = sld [smem:[#allocation0]]
  $region54: #{tpu_custom_call.1} parent=0
    _
  %s10 = ssub.s32 1, %s8
  %s11 = scalar_select 0, %s10, %s8
  %12 = sst [smem:[#allocation2]] %s6
  $region1: #{tpu_custom_call.1} parent=0
    #allocation3 [shape = 'u8[65536]{0}', space=vmem, size = 0x10000, scoped, tag = 'input window, operand 2, single buffered']
    #allocation4 [shape = 's32[1]{0}', space=sflag, size = 0x4, scoped, tag = 'scoped memory for tpu_custom_call.1']
    #allocation5 [shape = 'u8[8192]{0}', space=vmem, size = 0x2000, scoped, tag = 'input window, operand 3, single buffered']
    #allocation6 [shape = 's32[1]{0}', space=sflag, size = 0x4, scoped, tag = 'scoped memory for tpu_custom_call.1']
    #allocation7 [shape = 'u8[4096]{0}', space=vmem, size = 0x1000, scoped, tag = 'input window, operand 4, single buffered']
    #allocation8 [shape = 'u8[4096]{0}', space=vmem, size = 0x1000, scoped, tag = 'input window, operand 5, single buffered']
    #allocation9 [shape = 's32[1]{0}', space=sflag, size = 0x4, scoped, tag = 'scoped memory for tpu_custom_call.1']
    %13 = vsyncpa [#allocation4], 0
    %14 = vsyncpa [#allocation6], 0
    %15 = vsyncpa [#allocation9], 0
    // Predicated region
    $region2: #{tpu_custom_call.1} parent=1 // pred_check
      _
    $region3: #{tpu_custom_call.1} parent=1 // pred_check_branch
      %17 = sbr.rel (0) target = $region5
    $region4: #{tpu_custom_call.1} parent=1 // pred_region
      _
    $region5: #{tpu_custom_call.1} parent=1 // pred_fallthru
      _
    // Predicated region
    $region6: #{tpu_custom_call.1} parent=1 // pred_check
      _
    $region7: #{tpu_custom_call.1} parent=1 // pred_check_branch
      %19 = sbr.rel (0) target = $region9
    $region8: #{tpu_custom_call.1} parent=1 // pred_region
      _
    $region9: #{tpu_custom_call.1} parent=1 // pred_fallthru
      _
    // Predicated region
    $region10: #{tpu_custom_call.1} parent=1 // pred_check
      _
    $region11: #{tpu_custom_call.1} parent=1 // pred_check_branch
      %21 = sbr.rel (0) target = $region13
    $region12: #{tpu_custom_call.1} parent=1 // pred_region
      %23 = vsyncadd [#allocation4], 0
      %s24 = sshll.u32 %s2, 4
      %s25 = int_to_ptr.hbm [resolvable:$true] %s24
      %s26 = sshll.u32 [#allocation3], 4
      %s27 = int_to_ptr.vmem [resolvable:$true] %s26
      %32 = dma.hbm_to_vmem [thread:$0]  %s25, 2048, %s27, [#allocation4], 512, 512, 32
    $region13: #{tpu_custom_call.1} parent=1 // pred_fallthru
      _
    // Predicated region
    $region14: #{tpu_custom_call.1} parent=1 // pred_check
      _
    $region15: #{tpu_custom_call.1} parent=1 // pred_check_branch
      %34 = sbr.rel (0) target = $region17
    $region16: #{tpu_custom_call.1} parent=1 // pred_region
      %36 = vsyncadd [#allocation6], 0
      %s38 = sshll.u32 %s3, 4
      %s39 = int_to_ptr.hbm [resolvable:$true] %s38
      %s40 = sshll.u32 [#allocation5], 4
      %s41 = int_to_ptr.vmem [resolvable:$true] %s40
      %43 = dma.hbm_to_vmem [thread:$0]  %s39, 256, %s41, [#allocation6]
    $region17: #{tpu_custom_call.1} parent=1 // pred_fallthru
      _
    // Predicated region
    $region18: #{tpu_custom_call.1} parent=1 // pred_check
      _
    $region19: #{tpu_custom_call.1} parent=1 // pred_check_branch
      %45 = sbr.rel (0) target = $region21
    $region20: #{tpu_custom_call.1} parent=1 // pred_region
      %47 = vsyncadd [#allocation6], 0
      %s49 = sshll.u32 %s4, 4
      %s50 = int_to_ptr.hbm [resolvable:$true] %s49
      %s51 = sshll.u32 [#allocation7], 4
      %s52 = int_to_ptr.vmem [resolvable:$true] %s51
      %54 = dma.hbm_to_vmem [thread:$0]  %s50, 128, %s52, [#allocation6]
    $region21: #{tpu_custom_call.1} parent=1 // pred_fallthru
      _
    // Predicated region
    $region22: #{tpu_custom_call.1} parent=1 // pred_check
      _
    $region23: #{tpu_custom_call.1} parent=1 // pred_check_branch
      %56 = sbr.rel (0) target = $region25
    $region24: #{tpu_custom_call.1} parent=1 // pred_region
      %58 = vsyncadd [#allocation9], 0
      %s60 = sshll.u32 %s5, 4
      %s61 = int_to_ptr.hbm [resolvable:$true] %s60
      %s62 = sshll.u32 [#allocation8], 4
      %s63 = int_to_ptr.vmem [resolvable:$true] %s62
      %65 = dma.hbm_to_vmem [thread:$0]  %s61, 128, %s63, [#allocation9]
    $region25: #{tpu_custom_call.1} parent=1 // pred_fallthru
      _
    // Predicated region
    $region26: #{tpu_custom_call.1} parent=1 // pred_check
      _
    $region27: #{tpu_custom_call.1} parent=1 // pred_check_branch
      %67 = sbr.rel (0) target = $region29
    $region28: #{tpu_custom_call.1} parent=1 // pred_region
      _
    $region29: #{tpu_custom_call.1} parent=1 // pred_fallthru
      _
    // Predicated region
    $region30: #{tpu_custom_call.1} parent=1 // pred_check
      _
    $region31: #{tpu_custom_call.1} parent=1 // pred_check_branch
      %69 = sbr.rel (0) target = $region33
    $region32: #{tpu_custom_call.1} parent=1 // pred_region
      %71 = dma.done [#allocation4], 2048
    $region33: #{tpu_custom_call.1} parent=1 // pred_fallthru
      _
    // Predicated region
    $region34: #{tpu_custom_call.1} parent=1 // pred_check
      _
    $region35: #{tpu_custom_call.1} parent=1 // pred_check_branch
      %73 = sbr.rel (0) target = $region37
    $region36: #{tpu_custom_call.1} parent=1 // pred_region
      %75 = dma.done [#allocation6], 256
    $region37: #{tpu_custom_call.1} parent=1 // pred_fallthru
      _
    // Predicated region
    $region38: #{tpu_custom_call.1} parent=1 // pred_check
      _
    $region39: #{tpu_custom_call.1} parent=1 // pred_check_branch
      %77 = sbr.rel (0) target = $region41
    $region40: #{tpu_custom_call.1} parent=1 // pred_region
      %79 = dma.done [#allocation6], 128
    $region41: #{tpu_custom_call.1} parent=1 // pred_fallthru
      _
    // Predicated region
    $region42: #{tpu_custom_call.1} parent=1 // pred_check
      _
    $region43: #{tpu_custom_call.1} parent=1 // pred_check_branch
      %81 = sbr.rel (0) target = $region45
    $region44: #{tpu_custom_call.1} parent=1 // pred_region
      %83 = dma.done [#allocation9], 128
    $region45: #{tpu_custom_call.1} parent=1 // pred_fallthru
      _
    %v85 = vld [vmem:[%s1] sm:$0x1]
    %v86 = vld [vmem:[#allocation3] sm:$0xff]
    %v87 = vld [vmem:[#allocation3 + $0x8] sm:$0xff]
    %v88 = vld [vmem:[#allocation3 + $0x10] sm:$0xff]
    %v89 = vld [vmem:[#allocation3 + $0x18] sm:$0xff]
    %v90 = vld [vmem:[#allocation3 + $0x20] sm:$0xff]
    %v91 = vld [vmem:[#allocation3 + $0x28] sm:$0xff]
    %v92 = vld [vmem:[#allocation3 + $0x30] sm:$0xff]
    %v93 = vld [vmem:[#allocation3 + $0x38] sm:$0xff]
    %v94 = vld [vmem:[#allocation3 + $0x40] sm:$0xff]
    %v95 = vld [vmem:[#allocation3 + $0x48] sm:$0xff]
    %v96 = vld [vmem:[#allocation3 + $0x50] sm:$0xff]
    %v97 = vld [vmem:[#allocation3 + $0x58] sm:$0xff]
    %v98 = vld [vmem:[#allocation3 + $0x60] sm:$0xff]
    %v99 = vld [vmem:[#allocation3 + $0x68] sm:$0xff]
    %v100 = vld [vmem:[#allocation3 + $0x70] sm:$0xff]
    %v101 = vld [vmem:[#allocation3 + $0x78] sm:$0xff]
    %v102 = vld [vmem:[%s0] sm:$0x1]
    %v103 = vld [vmem:[#allocation5] sm:$0xff]
    %v104 = vld [vmem:[#allocation5 + $0x8] sm:$0xff]
    %106 = vst [vmem:[#allocation1] ss:$4 sm:$0xff] %v103
    %s108 = scalar_lea.vmem [#allocation1], 32
    %109 = vst [vmem:[%s108] ss:$4 sm:$0xff] %v104
    %v110 = vld.sshfl [vmem:[#allocation1] sm:$0xff pattern:$0x73625140]
    %v111 = vld.sshfl [vmem:[#allocation1 + $0x8] sm:$0xff pattern:$0x73625140]
    %v112 = vld.sshfl [vmem:[#allocation1 + $0x10] sm:$0xff pattern:$0x73625140]
    %v113 = vld.sshfl [vmem:[#allocation1 + $0x18] sm:$0xff pattern:$0x73625140]
    %v114 = vld.sshfl [vmem:[#allocation1 + $0x20] sm:$0xff pattern:$0x73625140]
    %v115 = vld.sshfl [vmem:[#allocation1 + $0x28] sm:$0xff pattern:$0x73625140]
    %v116 = vld.sshfl [vmem:[#allocation1 + $0x30] sm:$0xff pattern:$0x73625140]
    %v117 = vld.sshfl [vmem:[#allocation1 + $0x38] sm:$0xff pattern:$0x73625140]
    %vm118 = vcmask 31744
    %v120 = vsel %vm118, %v102, 0
    %vm122 = vcmask 1041408
    %v123 = vsel %vm122, %v110, 0
    %v125 = vsel %vm122, %v111, 0
    %v127 = vsel %vm122, %v112, 0
    %v129 = vsel %vm122, %v113, 0
    %v131 = vsel %vm122, %v114, 0
    %v133 = vsel %vm122, %v115, 0
    %v135 = vsel %vm122, %v116, 0
    %v137 = vsel %vm122, %v117, 0
    %139 = vmatpush.bf16.msra.mxu0 0
    %140 = vmatpush.bf16.msra.mxu0 0
    %141 = vmatpush.bf16.msra.mxu0 0
    %142 = vmatpush.bf16.msra.mxu0 0
    %143 = vmatpush.bf16.msra.mxu0 0
    %144 = vmatpush.bf16.msra.mxu0 0
    %145 = vmatpush.bf16.msra.mxu0 0
    %146 = vmatpush.bf16.msra.mxu0 %v123
    %147 = vmatmul.bf16.gmra.mxu0 %v120
    %v148 = vpop.f32.mrf.mxu0
    %v149 = vadd.f32 0.0, %v148
    %v150 = vpop.f32.mrf.mxu0
    %151 = vdwg.mxu0
    %152 = vmatpush.bf16.msra.mxu0 0
    %153 = vmatpush.bf16.msra.mxu0 0
    %154 = vmatpush.bf16.msra.mxu0 0
    %155 = vmatpush.bf16.msra.mxu0 0
    %156 = vmatpush.bf16.msra.mxu0 0
    %157 = vmatpush.bf16.msra.mxu0 0
    %158 = vmatpush.bf16.msra.mxu0 0
    %159 = vmatpush.bf16.msra.mxu0 %v125
    %160 = vmatmul.bf16.gmra.mxu0 %v120
    %v161 = vpop.f32.mrf.mxu0
    %v162 = vadd.f32 0.0, %v161
    %v163 = vpop.f32.mrf.mxu0
    %164 = vdwg.mxu0
    %165 = vmatpush.bf16.msra.mxu0 0
    %166 = vmatpush.bf16.msra.mxu0 0
    %167 = vmatpush.bf16.msra.mxu0 0
    %168 = vmatpush.bf16.msra.mxu0 0
    %169 = vmatpush.bf16.msra.mxu0 0
    %170 = vmatpush.bf16.msra.mxu0 0
    %171 = vmatpush.bf16.msra.mxu0 0
    %172 = vmatpush.bf16.msra.mxu0 %v127
    %173 = vmatmul.bf16.gmra.mxu0 %v120
    %v174 = vpop.f32.mrf.mxu0
    %v175 = vadd.f32 0.0, %v174
    %v176 = vpop.f32.mrf.mxu0
    %177 = vdwg.mxu0
    %178 = vmatpush.bf16.msra.mxu0 0
    %179 = vmatpush.bf16.msra.mxu0 0
    %180 = vmatpush.bf16.msra.mxu0 0
    %181 = vmatpush.bf16.msra.mxu0 0
    %182 = vmatpush.bf16.msra.mxu0 0
    %183 = vmatpush.bf16.msra.mxu0 0
    %184 = vmatpush.bf16.msra.mxu0 0
    %185 = vmatpush.bf16.msra.mxu0 %v129
    %186 = vmatmul.bf16.gmra.mxu0 %v120
    %v187 = vpop.f32.mrf.mxu0
    %v188 = vadd.f32 0.0, %v187
    %v189 = vpop.f32.mrf.mxu0
    %190 = vdwg.mxu0
    %191 = vmatpush.bf16.msra.mxu0 0
    %192 = vmatpush.bf16.msra.mxu0 0
    %193 = vmatpush.bf16.msra.mxu0 0
    %194 = vmatpush.bf16.msra.mxu0 0
    %195 = vmatpush.bf16.msra.mxu0 0
    %196 = vmatpush.bf16.msra.mxu0 0
    %197 = vmatpush.bf16.msra.mxu0 0
    %198 = vmatpush.bf16.msra.mxu0 %v131
    %199 = vmatmul.bf16.gmra.mxu0 %v120
    %v200 = vpop.f32.mrf.mxu0
    %v201 = vadd.f32 0.0, %v200
    %v202 = vpop.f32.mrf.mxu0
    %203 = vdwg.mxu0
    %204 = vmatpush.bf16.msra.mxu0 0
    %205 = vmatpush.bf16.msra.mxu0 0
    %206 = vmatpush.bf16.msra.mxu0 0
    %207 = vmatpush.bf16.msra.mxu0 0
    %208 = vmatpush.bf16.msra.mxu0 0
    %209 = vmatpush.bf16.msra.mxu0 0
    %210 = vmatpush.bf16.msra.mxu0 0
    %211 = vmatpush.bf16.msra.mxu0 %v133
    %212 = vmatmul.bf16.gmra.mxu0 %v120
    %v213 = vpop.f32.mrf.mxu0
    %v214 = vadd.f32 0.0, %v213
    %v215 = vpop.f32.mrf.mxu0
    %216 = vdwg.mxu0
    %217 = vmatpush.bf16.msra.mxu0 0
    %218 = vmatpush.bf16.msra.mxu0 0
    %219 = vmatpush.bf16.msra.mxu0 0
    %220 = vmatpush.bf16.msra.mxu0 0
    %221 = vmatpush.bf16.msra.mxu0 0
    %222 = vmatpush.bf16.msra.mxu0 0
    %223 = vmatpush.bf16.msra.mxu0 0
    %224 = vmatpush.bf16.msra.mxu0 %v135
    %225 = vmatmul.bf16.gmra.mxu0 %v120
    %v226 = vpop.f32.mrf.mxu0
    %v227 = vadd.f32 0.0, %v226
    %v228 = vpop.f32.mrf.mxu0
    %229 = vdwg.mxu0
    %230 = vmatpush.bf16.msra.mxu0 0
    %231 = vmatpush.bf16.msra.mxu0 0
    %232 = vmatpush.bf16.msra.mxu0 0
    %233 = vmatpush.bf16.msra.mxu0 0
    %234 = vmatpush.bf16.msra.mxu0 0
    %235 = vmatpush.bf16.msra.mxu0 0
    %236 = vmatpush.bf16.msra.mxu0 0
    %237 = vmatpush.bf16.msra.mxu0 %v137
    %238 = vmatmul.bf16.gmra.mxu0 %v120
    %v239 = vpop.f32.mrf.mxu0
    %v240 = vadd.f32 0.0, %v239
    %v241 = vpop.f32.mrf.mxu0
    %242 = vdwg.mxu0
    %v259 = vunpack.c.l.b16 %v86
    %v260 = vunpack.c.h.b16 %v86
    %v261 = vunpack.c.l.b16 %v87
    %v262 = vunpack.c.h.b16 %v87
    %v263 = vunpack.c.l.b16 %v88
    %v264 = vunpack.c.h.b16 %v88
    %v265 = vunpack.c.l.b16 %v89
    %v266 = vunpack.c.h.b16 %v89
    %v267 = vunpack.c.l.b16 %v90
    %v268 = vunpack.c.h.b16 %v90
    %v269 = vunpack.c.l.b16 %v91
    %v270 = vunpack.c.h.b16 %v91
    %v271 = vunpack.c.l.b16 %v92
    %v272 = vunpack.c.h.b16 %v92
    %v273 = vunpack.c.l.b16 %v93
    %v274 = vunpack.c.h.b16 %v93
    %v275 = vunpack.c.l.b16 %v94
    %v276 = vunpack.c.h.b16 %v94
    %v277 = vunpack.c.l.b16 %v95
    %v278 = vunpack.c.h.b16 %v95
    %v279 = vunpack.c.l.b16 %v96
    %v280 = vunpack.c.h.b16 %v96
    %v281 = vunpack.c.l.b16 %v97
    %v282 = vunpack.c.h.b16 %v97
    %v283 = vunpack.c.l.b16 %v98
    %v284 = vunpack.c.h.b16 %v98
    %v285 = vunpack.c.l.b16 %v99
    %v286 = vunpack.c.h.b16 %v99
    %v287 = vunpack.c.l.b16 %v100
    %v288 = vunpack.c.h.b16 %v100
    %v289 = vunpack.c.l.b16 %v101
    %v290 = vunpack.c.h.b16 %v101
    %v291 = vpack.c.b16 %v267, %v259
    %v292 = vpack.c.b16 %v268, %v260
    %v293 = vpack.c.b16 %v269, %v261
    %v294 = vpack.c.b16 %v270, %v262
    %v295 = vpack.c.b16 %v271, %v263
    %v296 = vpack.c.b16 %v272, %v264
    %v297 = vpack.c.b16 %v273, %v265
    %v298 = vpack.c.b16 %v274, %v266
    %v299 = vpack.c.b16 %v283, %v275
    %v300 = vpack.c.b16 %v284, %v276
    %v301 = vpack.c.b16 %v285, %v277
    %v302 = vpack.c.b16 %v286, %v278
    %v303 = vpack.c.b16 %v287, %v279
    %v304 = vpack.c.b16 %v288, %v280
    %v305 = vpack.c.b16 %v289, %v281
    %v306 = vpack.c.b16 %v290, %v282
    %vm323 = vcmask 261120
    %v325 = vsel %vm323, %v85, 0
    %327 = vmatpush.bf16.msra.mxu0 0
    %328 = vmatpush.bf16.msra.mxu0 0
    %329 = vmatpush.bf16.msra.mxu0 0
    %330 = vmatpush.bf16.msra.mxu0 0
    %331 = vmatpush.bf16.msra.mxu0 0
    %332 = vmatpush.bf16.msra.mxu0 0
    %333 = vmatpush.bf16.msra.mxu0 %v299
    %334 = vmatpush.bf16.msra.mxu0 %v291
    %335 = vmatmul.bf16.gmra.mxu0 %v325
    %v336 = vpop.f32.mrf.mxu0
    %v337 = vadd.f32 %v149, %v336
    %v338 = vpop.f32.mrf.mxu0
    %339 = vdwg.mxu0
    %340 = vmatpush.bf16.msra.mxu0 0
    %341 = vmatpush.bf16.msra.mxu0 0
    %342 = vmatpush.bf16.msra.mxu0 0
    %343 = vmatpush.bf16.msra.mxu0 0
    %344 = vmatpush.bf16.msra.mxu0 0
    %345 = vmatpush.bf16.msra.mxu0 0
    %346 = vmatpush.bf16.msra.mxu0 %v300
    %347 = vmatpush.bf16.msra.mxu0 %v292
    %348 = vmatmul.bf16.gmra.mxu0 %v325
    %v349 = vpop.f32.mrf.mxu0
    %v350 = vadd.f32 %v162, %v349
    %v351 = vpop.f32.mrf.mxu0
    %352 = vdwg.mxu0
    %353 = vmatpush.bf16.msra.mxu0 0
    %354 = vmatpush.bf16.msra.mxu0 0
    %355 = vmatpush.bf16.msra.mxu0 0
    %356 = vmatpush.bf16.msra.mxu0 0
    %357 = vmatpush.bf16.msra.mxu0 0
    %358 = vmatpush.bf16.msra.mxu0 0
    %359 = vmatpush.bf16.msra.mxu0 %v301
    %360 = vmatpush.bf16.msra.mxu0 %v293
    %361 = vmatmul.bf16.gmra.mxu0 %v325
    %v362 = vpop.f32.mrf.mxu0
    %v363 = vadd.f32 %v175, %v362
    %v364 = vpop.f32.mrf.mxu0
    %365 = vdwg.mxu0
    %366 = vmatpush.bf16.msra.mxu0 0
    %367 = vmatpush.bf16.msra.mxu0 0
    %368 = vmatpush.bf16.msra.mxu0 0
    %369 = vmatpush.bf16.msra.mxu0 0
    %370 = vmatpush.bf16.msra.mxu0 0
    %371 = vmatpush.bf16.msra.mxu0 0
    %372 = vmatpush.bf16.msra.mxu0 %v302
    %373 = vmatpush.bf16.msra.mxu0 %v294
    %374 = vmatmul.bf16.gmra.mxu0 %v325
    %v375 = vpop.f32.mrf.mxu0
    %v376 = vadd.f32 %v188, %v375
    %v377 = vpop.f32.mrf.mxu0
    %378 = vdwg.mxu0
    %379 = vmatpush.bf16.msra.mxu0 0
    %380 = vmatpush.bf16.msra.mxu0 0
    %381 = vmatpush.bf16.msra.mxu0 0
    %382 = vmatpush.bf16.msra.mxu0 0
    %383 = vmatpush.bf16.msra.mxu0 0
    %384 = vmatpush.bf16.msra.mxu0 0
    %385 = vmatpush.bf16.msra.mxu0 %v303
    %386 = vmatpush.bf16.msra.mxu0 %v295
    %387 = vmatmul.bf16.gmra.mxu0 %v325
    %v388 = vpop.f32.mrf.mxu0
    %v389 = vadd.f32 %v201, %v388
    %v390 = vpop.f32.mrf.mxu0
    %391 = vdwg.mxu0
    %392 = vmatpush.bf16.msra.mxu0 0
    %393 = vmatpush.bf16.msra.mxu0 0
    %394 = vmatpush.bf16.msra.mxu0 0
    %395 = vmatpush.bf16.msra.mxu0 0
    %396 = vmatpush.bf16.msra.mxu0 0
    %397 = vmatpush.bf16.msra.mxu0 0
    %398 = vmatpush.bf16.msra.mxu0 %v304
    %399 = vmatpush.bf16.msra.mxu0 %v296
    %400 = vmatmul.bf16.gmra.mxu0 %v325
    %v401 = vpop.f32.mrf.mxu0
    %v402 = vadd.f32 %v214, %v401
    %v403 = vpop.f32.mrf.mxu0
    %404 = vdwg.mxu0
    %405 = vmatpush.bf16.msra.mxu0 0
    %406 = vmatpush.bf16.msra.mxu0 0
    %407 = vmatpush.bf16.msra.mxu0 0
    %408 = vmatpush.bf16.msra.mxu0 0
    %409 = vmatpush.bf16.msra.mxu0 0
    %410 = vmatpush.bf16.msra.mxu0 0
    %411 = vmatpush.bf16.msra.mxu0 %v305
    %412 = vmatpush.bf16.msra.mxu0 %v297
    %413 = vmatmul.bf16.gmra.mxu0 %v325
    %v414 = vpop.f32.mrf.mxu0
    %v415 = vadd.f32 %v227, %v414
    %v416 = vpop.f32.mrf.mxu0
    %417 = vdwg.mxu0
    %418 = vmatpush.bf16.msra.mxu0 0
    %419 = vmatpush.bf16.msra.mxu0 0
    %420 = vmatpush.bf16.msra.mxu0 0
    %421 = vmatpush.bf16.msra.mxu0 0
    %422 = vmatpush.bf16.msra.mxu0 0
    %423 = vmatpush.bf16.msra.mxu0 0
    %424 = vmatpush.bf16.msra.mxu0 %v306
    %425 = vmatpush.bf16.msra.mxu0 %v298
    %426 = vmatmul.bf16.gmra.mxu0 %v325
    %v427 = vpop.f32.mrf.mxu0
    %v428 = vadd.f32 %v240, %v427
    %v429 = vpop.f32.mrf.mxu0
    %430 = vdwg.mxu0
    %v431 = vld [vmem:[#allocation7] sm:$0xff]
    %v433 = vperm.slane %v431, 0
    %v434 = vperm.slane %v431, 1
    %v435 = vperm.slane %v431, 2
    %v436 = vperm.slane %v431, 3
    %v437 = vperm.slane %v431, 4
    %v438 = vperm.slane %v431, 5
    %v439 = vperm.slane %v431, 6
    %v440 = vperm.slane %v431, 7
    %v449 = vadd.f32 %v337, %v433
    %v450 = vadd.f32 %v350, %v434
    %v451 = vadd.f32 %v363, %v435
    %v452 = vadd.f32 %v376, %v436
    %v453 = vadd.f32 %v389, %v437
    %v454 = vadd.f32 %v402, %v438
    %v455 = vadd.f32 %v415, %v439
    %v456 = vadd.f32 %v428, %v440
    %v457 = vmul.f32 %v449, 0.01
    %v458 = vmul.f32 %v450, 0.01
    %v459 = vmul.f32 %v451, 0.01
    %v460 = vmul.f32 %v452, 0.01
    %v461 = vmul.f32 %v453, 0.01
    %v462 = vmul.f32 %v454, 0.01
    %v463 = vmul.f32 %v455, 0.01
    %v464 = vmul.f32 %v456, 0.01
    %v465 = vmax.f32 %v449, %v457
    %v466 = vmax.f32 %v450, %v458
    %v467 = vmax.f32 %v451, %v459
    %v468 = vmax.f32 %v452, %v460
    %v469 = vmax.f32 %v453, %v461
    %v470 = vmax.f32 %v454, %v462
    %v471 = vmax.f32 %v455, %v463
    %v472 = vmax.f32 %v456, %v464
    %v473 = vld [vmem:[#allocation8] sm:$0xff]
    %v475 = vperm.slane %v473, 0
    %v476 = vperm.slane %v473, 1
    %v477 = vperm.slane %v473, 2
    %v478 = vperm.slane %v473, 3
    %v479 = vperm.slane %v473, 4
    %v480 = vperm.slane %v473, 5
    %v481 = vperm.slane %v473, 6
    %v482 = vperm.slane %v473, 7
    %v491 = vmul.f32 %v465, %v475
    %v492 = vmul.f32 %v466, %v476
    %v493 = vmul.f32 %v467, %v477
    %v494 = vmul.f32 %v468, %v478
    %v495 = vmul.f32 %v469, %v479
    %v496 = vmul.f32 %v470, %v480
    %v497 = vmul.f32 %v471, %v481
    %v498 = vmul.f32 %v472, %v482
    %v499 = vsel %vm122, %v491, 0.0
    %v500 = vsel %vm122, %v492, 0.0
    %v501 = vadd.f32 %v499, %v500
    %v502 = vsel %vm122, %v493, 0.0
    %v503 = vadd.f32 %v501, %v502
    %v504 = vsel %vm122, %v494, 0.0
    %v505 = vadd.f32 %v503, %v504
    %v506 = vsel %vm122, %v495, 0.0
    %v507 = vadd.f32 %v505, %v506
    %v508 = vsel %vm122, %v496, 0.0
    %v509 = vadd.f32 %v507, %v508
    %v510 = vsel %vm122, %v497, 0.0
    %v511 = vadd.f32 %v509, %v510
    %v512 = vsel %vm122, %v498, 0.0
    %v513 = vadd.f32 %v511, %v512
    %514 = vadd.xlane.f32.xlu0 %v513
    %v515 = vpop.xlane.xlu0 %514
    %s516 = sld [smem:[#allocation2]]
    %v517 = vstv %s516
    %v518 = vadd.f32 %v515, %v517
    %v519 = vsub.f32 0.0, %v518
    %v520 = vmul.f32 %v519, 1.442695
    %v521 = vpow.pop %v520
    %v522 = vadd.f32 %v521, 1.0
    %v523 = vrcp.pop %v522
    %v524 = vmul.f32 %v522, %v523
    %v525 = vsub.f32 1.0, %v524
    %v526 = vmul.f32 %v523, %v525
    %v527 = vadd.f32 %v523, %v526
    %vm528 = vweird.f32 %v522
    %vm529 = vweird.f32 %v523
    %vm530 = vmor %vm528, %vm529
    %v531 = vsel %vm530, %v523, %v527
    %v532 = vand.u32 2147483647, %v522
    %vm533 = vcmp.eq.f32.partialorder %v532, 8.507059e+37
    %v534 = vand.u32 %v522, 2147483648
    %v535 = vor.u32 1.1754944e-38, %v534
    %v536 = vsel %vm533, %v535, %v531
    %v537 = vmul.f32 1.0, %v536
    %vm538 = vcmask 1024
    %539 = vst.msk [vmem:[%s7] sm:$0x3] %vm538, %v537
    // Predicated region
    $region46: #{tpu_custom_call.1} parent=1 // pred_check
      _
    $region47: #{tpu_custom_call.1} parent=1 // pred_check_branch
      %541 = sbr.rel (0) target = $region49
    $region48: #{tpu_custom_call.1} parent=1 // pred_region
      _
    $region49: #{tpu_custom_call.1} parent=1 // pred_fallthru
      _
    // Predicated region
    $region50: #{tpu_custom_call.1} parent=1 // pred_check
      _
    $region51: #{tpu_custom_call.1} parent=1 // pred_check_branch
      %543 = sbr.rel (0) target = $region53
    $region52: #{tpu_custom_call.1} parent=1 // pred_region
      _
    $region53: #{tpu_custom_call.1} parent=1 // pred_fallthru
      _
    %544 = vsyncpa [#allocation4], 1
    %545 = vsyncpa [#allocation6], 1
    %546 = vsyncpa [#allocation9], 1

</llo_original>
